<compile_context>
chip_gen: v6e
topology: v6e:2x2x1
jax: 0.10.0
libtpu: 0.0.40
codegen_flags: <defaults>
</compile_context>

<pallas_src>
import jax
import jax.numpy as jnp
from jax.experimental import pallas as pl
from jax.experimental.pallas import tpu as pltpu


def _round_up(x, m):
    return ((x + m - 1) // m) * m


def _round_down(x, m):
    return (x // m) * m


def epic_doc_quality_kernel(x_ref, w_ref, b_ref, o_ref):
    # x_ref: (TB, D) block of [CLS] embeddings (VMEM)
    # w_ref: (1, D)  linear weight (PyTorch nn.Linear layout), VMEM-resident
    # b_ref: (1, 1)  linear bias (SMEM scalar)
    # o_ref: (1, TB) lane-dense sigmoid scores for this batch tile
    x = x_ref[...]
    w = w_ref[...]
    b = b_ref[0, 0]
    # (1, D) . (TB, D)^T -> (1, TB): K-reduction on the MXU, f32 accumulate.
    logits = jax.lax.dot_general(
        w, x,
        dimension_numbers=(((1,), (1,)), ((), ())),
        preferred_element_type=jnp.float32,
    ) + b
    # Sigmoid: exp() runs on the EUP; the divide touches only TB elements per
    # tile (negligible next to the TB*D bytes streamed), so keep the exact form.
    s = 1.0 / (1.0 + jnp.exp(-logits))
    o_ref[...] = s.astype(o_ref.dtype)


def epic_doc_quality(x, w, b, *, tile_b=None):
    """EPIC doc-quality head: sigmoid(x @ w.T + b).

    x: (..., D) [CLS] embeddings (f32 or bf16).
    w: (1, D) linear weight (PyTorch nn.Linear layout).
    b: bias (scalar / (1,) / (1, 1)).
    Returns (..., 1) float32 scores.
    """
    x = jnp.asarray(x)
    orig_lead = x.shape[:-1]
    D = x.shape[-1]
    x2d = x.reshape(-1, D)
    B = x2d.shape[0]
    itemsize = jnp.dtype(x2d.dtype).itemsize

    # Lane-dense batch tile (multiple of 128).  Aim for a few MiB of x per
    # buffer (measured HBM-roofline sweet spot); clamp so tiny batches don't
    # over-pad and huge D doesn't blow VMEM.
    if tile_b is None:
        target_bytes = 4 << 20
        tb = _round_down(max(target_bytes // max(D * itemsize, 1), 128), 128)
        tb = max(128, min(tb, 2048))
    else:
        tb = _round_up(max(int(tile_b), 128), 128)
    tb = min(tb, _round_up(B, 128))

    b_pad = _round_up(B, tb)
    if b_pad != B:
        x2d = jnp.pad(x2d, ((0, b_pad - B), (0, 0)))

    w2 = jnp.asarray(w).reshape(1, D).astype(x2d.dtype)
    b2 = jnp.asarray(b, dtype=jnp.float32).reshape(1, 1)

    grid = (b_pad // tb,)

    # VMEM budget: x double-buffered + resident weight + double-buffered output.
    vmem_need = 2 * tb * D * itemsize + 2 * D * itemsize + 4 * tb * 4
    # Raise the scoped limit (v5e defaults to ~16 MiB) but stay under v7x's
    # 64 MiB physical VMEM.
    vmem_limit = int(min(max(2 * vmem_need, 32 << 20), 56 << 20))

    out = pl.pallas_call(
        epic_doc_quality_kernel,
        out_shape=jax.ShapeDtypeStruct((1, b_pad), jnp.float32),
        grid_spec=pltpu.PrefetchScalarGridSpec(
            num_scalar_prefetch=0,
            grid=grid,
            in_specs=[
                pl.BlockSpec((tb, D), lambda i: (i, 0)),             # x tile
                pl.BlockSpec((1, D), lambda i: (0, 0)),              # weight (resident)
                pl.BlockSpec(memory_space=pltpu.MemorySpace.SMEM),   # bias scalar
            ],
            out_specs=pl.BlockSpec((1, tb), lambda i: (0, i)),       # lane-dense row
        ),
        compiler_params=pltpu.CompilerParams(
            dimension_semantics=("parallel",),   # shards across v7x's 2 TCs
            vmem_limit_bytes=vmem_limit,
        ),
    )(x2d, w2, b2)

    return out.reshape(b_pad, 1)[:B].reshape(orig_lead + (1,))


if __name__ == "__main__":
    # Small shapes consistent with the module: batch=8 [CLS] vectors of dim=32.
    B, D = 8, 32
    key = jax.random.PRNGKey(0)
    kx, kw, kb = jax.random.split(key, 3)

    x = jax.random.normal(kx, (B, D), dtype=jnp.float32)
    # PyTorch parameter shapes: weight (1, dim), bias (1,)
    w = jax.random.normal(kw, (1, D), dtype=jnp.float32) * (1.0 / jnp.sqrt(D))
    b = jax.random.normal(kb, (1,), dtype=jnp.float32) * 0.1

    out = jax.block_until_ready(epic_doc_quality(x, w, b))
    ref = jax.nn.sigmoid(x @ w.T + b.reshape(1, 1))
    assert out.shape == (B, 1)
    assert jnp.allclose(out, ref, atol=1e-5, rtol=1e-5), "mismatch vs reference"

    # Exercise the padding + multi-tile (grid > 1) lane-dense output path.
    B2 = 300
    x2 = jax.random.normal(kx, (B2, D), dtype=jnp.float32)
    out2 = jax.block_until_ready(epic_doc_quality(x2, w, b, tile_b=128))
    ref2 = jax.nn.sigmoid(x2 @ w.T + b.reshape(1, 1))
    assert out2.shape == (B2, 1)
    assert jnp.allclose(out2, ref2, atol=1e-5, rtol=1e-5), "mismatch vs reference (tail)"

    # Exercise bf16 input + extra leading dim (nn.Linear acts on the last axis).
    x3 = jax.random.normal(kx, (2, 5, D), dtype=jnp.bfloat16)
    out3 = jax.block_until_ready(epic_doc_quality(x3, w, b))
    ref3 = jax.nn.sigmoid(x3.astype(jnp.float32) @ w.T + b.reshape(1, 1))
    assert out3.shape == (2, 5, 1)
    assert jnp.allclose(out3, ref3, atol=2e-2, rtol=2e-2), "mismatch vs reference (bf16)"

    print("KERNEL_OK")
</pallas_src>

<mosaic_0001>
module attributes {stable_mosaic.version = 11 : i64} {
  func.func @epic_doc_quality_kernel(%arg0: i32, %arg1: memref<128x32xf32, #tpu.memory_space<vmem>>, %arg2: memref<1x32xf32, #tpu.memory_space<vmem>>, %arg3: memref<1x1xf32, #tpu.memory_space<smem>>, %arg4: memref<1x128xf32, #tpu.memory_space<vmem>>) attributes {dimension_semantics = [#tpu.dimension_semantics<parallel>], iteration_bounds = array<i64: 1>, scalar_prefetch = 0 : i64, scratch_operands = 0 : i64, tpu.core_type = #tpu.core_type<tc>, window_params = [{transform_indices = @transform_0, window_bounds = array<i64: 128, 32>}, {pipeline_mode = #tpu.pipeline_mode<synchronous>, transform_indices = @transform_1, window_bounds = array<i64: 1, 32>}, {transform_indices = @transform_2, window_bounds = array<i64: 1, 1>}, {transform_indices = @transform_3, window_bounds = array<i64: 1, 128>}]} {
    %c0 = arith.constant 0 : index
    %c0_0 = arith.constant 0 : index
    %0 = vector.load %arg1[%c0, %c0_0] : memref<128x32xf32, #tpu.memory_space<vmem>>, vector<128x32xf32>
    %c0_1 = arith.constant 0 : index
    %c0_2 = arith.constant 0 : index
    %1 = vector.load %arg2[%c0_1, %c0_2] : memref<1x32xf32, #tpu.memory_space<vmem>>, vector<1x32xf32>
    %c0_3 = arith.constant 0 : index
    %c0_4 = arith.constant 0 : index
    %2 = memref.load %arg3[%c0_3, %c0_4] : memref<1x1xf32, #tpu.memory_space<smem>>
    %cst = arith.constant dense<0.000000e+00> : vector<1x128xf32>
    %3 = tpu.matmul %1, %0, %cst {dimension_numbers = #tpu.dot_dimension_numbers<[1], [1], [0], [0], [0, 0, 1, 0], [], []>} : vector<1x32xf32>, vector<128x32xf32>, vector<1x128xf32> -> vector<1x128xf32>
    %4 = vector.broadcast %2 : f32 to vector<1x128xf32>
    %5 = arith.addf %3, %4 : vector<1x128xf32>
    %cst_5 = arith.constant 0.000000e+00 : f32
    %6 = vector.broadcast %cst_5 : f32 to vector<1x128xf32>
    %7 = arith.subf %6, %5 : vector<1x128xf32>
    %8 = math.exp %7 : vector<1x128xf32>
    %cst_6 = arith.constant 1.000000e+00 : f32
    %9 = vector.broadcast %cst_6 : f32 to vector<1x128xf32>
    %10 = arith.addf %9, %8 : vector<1x128xf32>
    %cst_7 = arith.constant 1.000000e+00 : f32
    %11 = vector.broadcast %cst_7 : f32 to vector<1x128xf32>
    %12 = arith.divf %11, %10 : vector<1x128xf32>
    %c0_8 = arith.constant 0 : index
    %c0_9 = arith.constant 0 : index
    %13 = vector.load %arg4[%c0_8, %c0_9] : memref<1x128xf32, #tpu.memory_space<vmem>>, vector<1x128xf32>
    tpu.vector_store %arg4[%c0_8, %c0_9], %12 {strides = array<i32>} : memref<1x128xf32, #tpu.memory_space<vmem>>, vector<1x128xf32>,
    return
  }
  func.func @transform_0(%arg0: i32) -> (i32, i32) {
    %c0_i32 = arith.constant 0 : i32
    %c0_i32_0 = arith.constant 0 : i32
    return %arg0, %c0_i32 : i32, i32
  }
  func.func @transform_1(%arg0: i32) -> (i32, i32) {
    %c0_i32 = arith.constant 0 : i32
    %c0_i32_0 = arith.constant 0 : i32
    %c0_i32_1 = arith.constant 0 : i32
    return %c0_i32, %c0_i32_0 : i32, i32
  }
  func.func @transform_2(%arg0: i32) -> (i32, i32) {
    %c0_i32 = arith.constant 0 : i32
    %c0_i32_0 = arith.constant 0 : i32
    %c0_i32_1 = arith.constant 0 : i32
    return %c0_i32, %c0_i32_0 : i32, i32
  }
  func.func @transform_3(%arg0: i32) -> (i32, i32) {
    %c0_i32 = arith.constant 0 : i32
    %c0_i32_0 = arith.constant 0 : i32
    return %c0_i32, %arg0 : i32, i32
  }
}

</mosaic_0001>

<llo_original>
// kernel: tpu_custom_call.1
$region0: #{tpu_custom_call.1}
  #allocation0 [shape = 'u32[]', space=smem, size = 0x4, offset = 0x4, fixed_abs, tag = 'smem constant byte address 0x4 - core index']
  #allocation1 [shape = 'u32[144,128]{1,0:T(1,128)}', space=vmem, size = 0x12000, scoped, tag = 'internal scratch']
  #allocation2 [shape = 'f32[1,1]{1,0:T(1,128)S(6)}', space=smem, size = 0x200, scoped, tag = 'scoped memory for tpu_custom_call.1']
  %s0 = inlined_call_operand.vmem [shape: f32[128,32], index: 0, kind: input, shape index: {}]
  %s1 = inlined_call_operand.vmem [shape: f32[1,32], index: 1, kind: input, shape index: {}]
  %s2 = inlined_call_operand.<no memory space> [shape: f32[1,1], index: 2, kind: input, shape index: {}]
  %s3 = inlined_call_operand.hbm [shape: f32[1,128], index: 3, kind: output, shape index: {}]
  %s4 = sld [smem:[#allocation0]]
  $region22: #{tpu_custom_call.1} parent=0
    _
  %s6 = ssub.s32 1, %s4
  %s7 = scalar_select 0, %s6, %s4
  %8 = sst [smem:[#allocation2]] %s2
  $region1: #{tpu_custom_call.1} parent=0
    #allocation3 [shape = 'u8[512]{0}', space=vmem, size = 0x400, scoped, tag = 'output window, operand 0, single buffered']
    #allocation4 [shape = 's32[1]{0}', space=sflag, size = 0x4, scoped, tag = 'scoped memory for tpu_custom_call.1']
    %9 = vsyncpa [#allocation4], 0
    // Predicated region
    $region2: #{tpu_custom_call.1} parent=1 // pred_check
      _
    $region3: #{tpu_custom_call.1} parent=1 // pred_check_branch
      %11 = sbr.rel (0) target = $region5
    $region4: #{tpu_custom_call.1} parent=1 // pred_region
      _
    $region5: #{tpu_custom_call.1} parent=1 // pred_fallthru
      _
    // Predicated region
    $region6: #{tpu_custom_call.1} parent=1 // pred_check
      _
    $region7: #{tpu_custom_call.1} parent=1 // pred_check_branch
      %13 = sbr.rel (0) target = $region9
    $region8: #{tpu_custom_call.1} parent=1 // pred_region
      _
    $region9: #{tpu_custom_call.1} parent=1 // pred_fallthru
      _
    // Predicated region
    $region10: #{tpu_custom_call.1} parent=1 // pred_check
      _
    $region11: #{tpu_custom_call.1} parent=1 // pred_check_branch
      %15 = sbr.rel (0) target = $region13
    $region12: #{tpu_custom_call.1} parent=1 // pred_region
      _
    $region13: #{tpu_custom_call.1} parent=1 // pred_fallthru
      _
    %v16 = vld [vmem:[%s0] sm:$0xff]
    %v17 = vld [vmem:[%s0 + $0x8] sm:$0xff]
    %v18 = vld [vmem:[%s0 + $0x10] sm:$0xff]
    %v19 = vld [vmem:[%s0 + $0x18] sm:$0xff]
    %v20 = vld [vmem:[%s0 + $0x20] sm:$0xff]
    %v21 = vld [vmem:[%s0 + $0x28] sm:$0xff]
    %v22 = vld [vmem:[%s0 + $0x30] sm:$0xff]
    %v23 = vld [vmem:[%s0 + $0x38] sm:$0xff]
    %v24 = vld [vmem:[%s0 + $0x40] sm:$0xff]
    %v25 = vld [vmem:[%s0 + $0x48] sm:$0xff]
    %v26 = vld [vmem:[%s0 + $0x50] sm:$0xff]
    %v27 = vld [vmem:[%s0 + $0x58] sm:$0xff]
    %v28 = vld [vmem:[%s0 + $0x60] sm:$0xff]
    %v29 = vld [vmem:[%s0 + $0x68] sm:$0xff]
    %v30 = vld [vmem:[%s0 + $0x70] sm:$0xff]
    %v31 = vld [vmem:[%s0 + $0x78] sm:$0xff]
    %v32 = vld [vmem:[%s1] sm:$0x1]
    %s33 = sld [smem:[#allocation2]]
    %v34 = vstv %s33
    %vm35 = vcmask 261120
    %v37 = vsel %vm35, %v32, 0
    %v40 = vsel %vm35, %v16, 0
    %v43 = vsel %vm35, %v17, 0
    %v46 = vsel %vm35, %v18, 0
    %v49 = vsel %vm35, %v19, 0
    %v52 = vsel %vm35, %v20, 0
    %v55 = vsel %vm35, %v21, 0
    %v58 = vsel %vm35, %v22, 0
    %v61 = vsel %vm35, %v23, 0
    %v64 = vsel %vm35, %v24, 0
    %v67 = vsel %vm35, %v25, 0
    %v70 = vsel %vm35, %v26, 0
    %v73 = vsel %vm35, %v27, 0
    %v76 = vsel %vm35, %v28, 0
    %v79 = vsel %vm35, %v29, 0
    %v82 = vsel %vm35, %v30, 0
    %v85 = vsel %vm35, %v31, 0
    %87 = vmatprep.subr.mxu0 0.0
    %88 = vmatpush1.xpose.msra.mxu0 %v85
    %89 = vmatprep.subr.mxu0 0.0
    %90 = vmatpush1.xpose.msra.mxu0 %v82
    %91 = vmatprep.subr.mxu0 0.0
    %92 = vmatpush1.xpose.msra.mxu0 %v79
    %93 = vmatprep.subr.mxu0 0.0
    %94 = vmatpush1.xpose.msra.mxu0 %v76
    %95 = vmatprep.subr.mxu0 0.0
    %96 = vmatpush1.xpose.msra.mxu0 %v73
    %97 = vmatprep.subr.mxu0 0.0
    %98 = vmatpush1.xpose.msra.mxu0 %v70
    %99 = vmatprep.subr.mxu0 0.0
    %100 = vmatpush1.xpose.msra.mxu0 %v67
    %101 = vmatprep.subr.mxu0 0.0
    %102 = vmatpush1.xpose.msra.mxu0 %v64
    %103 = vmatprep.subr.mxu0 0.0
    %104 = vmatpush1.xpose.msra.mxu0 %v61
    %105 = vmatprep.subr.mxu0 0.0
    %106 = vmatpush1.xpose.msra.mxu0 %v58
    %107 = vmatprep.subr.mxu0 0.0
    %108 = vmatpush1.xpose.msra.mxu0 %v55
    %109 = vmatprep.subr.mxu0 0.0
    %110 = vmatpush1.xpose.msra.mxu0 %v52
    %111 = vmatprep.subr.mxu0 0.0
    %112 = vmatpush1.xpose.msra.mxu0 %v49
    %113 = vmatprep.subr.mxu0 0.0
    %114 = vmatpush1.xpose.msra.mxu0 %v46
    %115 = vmatprep.subr.mxu0 0.0
    %116 = vmatpush1.xpose.msra.mxu0 %v43
    %117 = vmatprep.subr.mxu0 0.0
    %118 = vmatpush1.xpose.msra.mxu0 %v40
    %119 = vmatprep.subr.mxu0 0.0
    %120 = vmatpush2.xpose.msra.mxu0 0.0
    %121 = vmatprep.subr.mxu0 0.0
    %122 = vmatpush2.xpose.msra.mxu0 0.0
    %123 = vmatprep.subr.mxu0 0.0
    %124 = vmatpush2.xpose.msra.mxu0 0.0
    %125 = vmatprep.subr.mxu0 0.0
    %126 = vmatpush2.xpose.msra.mxu0 0.0
    %127 = vmatprep.subr.mxu0 0.0
    %128 = vmatpush2.xpose.msra.mxu0 0.0
    %129 = vmatprep.subr.mxu0 0.0
    %130 = vmatpush2.xpose.msra.mxu0 0.0
    %131 = vmatprep.subr.mxu0 0.0
    %132 = vmatpush2.xpose.msra.mxu0 0.0
    %133 = vmatprep.subr.mxu0 0.0
    %134 = vmatpush2.xpose.msra.mxu0 0.0
    %135 = vmatprep.subr.mxu0 0.0
    %136 = vmatpush2.xpose.msra.mxu0 0.0
    %137 = vmatprep.subr.mxu0 0.0
    %138 = vmatpush2.xpose.msra.mxu0 0.0
    %139 = vmatprep.subr.mxu0 0.0
    %140 = vmatpush2.xpose.msra.mxu0 0.0
    %141 = vmatprep.subr.mxu0 0.0
    %142 = vmatpush2.xpose.msra.mxu0 0.0
    %143 = vmatprep.subr.mxu0 0.0
    %144 = vmatpush2.xpose.msra.mxu0 0.0
    %145 = vmatprep.subr.mxu0 0.0
    %146 = vmatpush2.xpose.msra.mxu0 0.0
    %147 = vmatprep.subr.mxu0 0.0
    %148 = vmatpush2.xpose.msra.mxu0 0.0
    %149 = vmatprep.subr.mxu0 0.0
    %150 = vmatpush2.xpose.msra.mxu0 0.0
    %151 = vmatprep.mubr.f32.mxu0 0.0
    %152 = vmatmul.mubr.f32.gmra.mxu0 %v37
    %v153 = vpop.f32.mrf.mxu0
    %v154 = vadd.f32 %v34, %v153
    %v155 = vpop.f32.mrf.mxu0
    %156 = vdwg.mxu0
    %v157 = vsub.f32 0.0, %v154
    %v158 = vmul.f32 %v157, 1.442695
    %v159 = vpow.pop %v158
    %v160 = vadd.f32 %v159, 1.0
    %v161 = vrcp.pop %v160
    %v162 = vmul.f32 1.0, %v161
    %163 = vst [vmem:[#allocation3] sm:$0x1] %v162
    // Predicated region
    $region14: #{tpu_custom_call.1} parent=1 // pred_check
      _
    $region15: #{tpu_custom_call.1} parent=1 // pred_check_branch
      %165 = sbr.rel (0) target = $region17
    $region16: #{tpu_custom_call.1} parent=1 // pred_region
      %s167 = ssub.s32 16, 16
      %168 = vsyncadd [#allocation4], %s167
      %s170 = sshll.u32 [#allocation3], 4
      %s171 = int_to_ptr.vmem [resolvable:$true] %s170
      %173 = dma.vmem_to_hbm [thread:$0]  %s171, 16, %s3, [#allocation4]
    $region17: #{tpu_custom_call.1} parent=1 // pred_fallthru
      _
    // Predicated region
    $region18: #{tpu_custom_call.1} parent=1 // pred_check
      _
    $region19: #{tpu_custom_call.1} parent=1 // pred_check_branch
      %175 = sbr.rel (0) target = $region21
    $region20: #{tpu_custom_call.1} parent=1 // pred_region
      %176 = dma.done [#allocation4], 16
    $region21: #{tpu_custom_call.1} parent=1 // pred_fallthru
      _
    %177 = vsyncpa [#allocation4], 1

</llo_original>
